<compile_context>
chip_gen: v7x
topology: tpu7x:2x2x1
jax: 0.10.0
libtpu: 0.0.40
codegen_flags: <defaults>
</compile_context>

<pallas_src>
import jax
import jax.numpy as jnp
from jax.experimental import pallas as pl
from jax.experimental.pallas import tpu as pltpu


def _round_up(x, m):
    return ((x + m - 1) // m) * m


def ndn_kernel(x_ref, w1_ref, b1_ref, w2_ref, b2_ref, w3_ref, b3_ref, out_ref):
    # ---- feature extractor: Linear -> ReLU -> Linear -> ReLU ----
    # bf16 operands into the MXU, f32 accumulation, f32 elementwise epilogue.
    x = x_ref[...]                                                    # (TB, D_IN) bf16
    h = jnp.dot(x, w1_ref[...], preferred_element_type=jnp.float32)
    h = jnp.maximum(h + b1_ref[...], 0.0)
    h = jnp.dot(h.astype(jnp.bfloat16), w2_ref[...],
                preferred_element_type=jnp.float32)
    h = jnp.maximum(h + b2_ref[...], 0.0)

    # ---- density estimator: Linear -> Softplus ----
    z = jnp.dot(h.astype(jnp.bfloat16), w3_ref[...],
                preferred_element_type=jnp.float32)
    out_ref[...] = jax.nn.softplus(z + b3_ref[...]).astype(out_ref.dtype)


def neural_density_network(x, params, *, tile_b=1024):
    """x: (B, D_IN) float32. Returns (B, D_OUT) float32 densities (>= 0)."""
    w1, b1, w2, b2, w3, b3 = params
    B, d_in = x.shape
    hidden = w1.shape[1]
    d_out = w3.shape[1]

    # --- lane-dense feature padding (hidden / output dims -> multiples of 128) ---
    h_pad = _round_up(hidden, 128)
    o_pad = _round_up(d_out, 128)
    bf16 = jnp.bfloat16
    w1p = jnp.zeros((d_in, h_pad), bf16).at[:, :hidden].set(w1.astype(bf16))
    b1p = jnp.zeros((1, h_pad), jnp.float32).at[:, :hidden].set(b1)
    w2p = jnp.zeros((h_pad, h_pad), bf16).at[:hidden, :hidden].set(w2.astype(bf16))
    b2p = jnp.zeros((1, h_pad), jnp.float32).at[:, :hidden].set(b2)
    w3p = jnp.zeros((h_pad, o_pad), bf16).at[:hidden, :d_out].set(w3.astype(bf16))
    b3p = jnp.zeros((1, o_pad), jnp.float32).at[:, :d_out].set(b3)

    # --- batch tiling: big tiles, clamp for small B, pad B to a tile multiple ---
    tile_b = max(8, min(tile_b, _round_up(B, 8)))
    b_pad = _round_up(B, tile_b)
    xb = x.astype(bf16)
    if b_pad != B:
        xb = jnp.pad(xb, ((0, b_pad - B), (0, 0)))

    grid = (b_pad // tile_b,)
    resident = lambda shape: pl.BlockSpec(shape, lambda i: (0, 0))   # VMEM-resident params

    flops = 2 * b_pad * (d_in * h_pad + h_pad * h_pad + h_pad * o_pad)
    bytes_accessed = (xb.size * 2 + b_pad * o_pad * 4
                      + (w1p.size + w2p.size + w3p.size) * 2
                      + (b1p.size + b2p.size + b3p.size) * 4)
    cost = pl.CostEstimate(flops=flops,
                           transcendentals=2 * b_pad * o_pad,        # exp + log1p per output
                           bytes_accessed=bytes_accessed)

    out = pl.pallas_call(
        ndn_kernel,
        out_shape=jax.ShapeDtypeStruct((b_pad, o_pad), jnp.float32),
        grid_spec=pltpu.PrefetchScalarGridSpec(
            num_scalar_prefetch=0,
            grid=grid,
            in_specs=[
                pl.BlockSpec((tile_b, d_in), lambda i: (i, 0)),      # x tile
                resident((d_in, h_pad)), resident((1, h_pad)),       # layer 1
                resident((h_pad, h_pad)), resident((1, h_pad)),      # layer 2
                resident((h_pad, o_pad)), resident((1, o_pad)),      # density head
            ],
            out_specs=pl.BlockSpec((tile_b, o_pad), lambda i: (i, 0)),
        ),
        compiler_params=pltpu.CompilerParams(
            dimension_semantics=("parallel",)),                      # shards grid across v7x TCs
        cost_estimate=cost,
    )(xb, w1p, b1p, w2p, b2p, w3p, b3p)

    return out[:B, :d_out]


def init_params(key, d_in, hidden, d_out):
    ks = jax.random.split(key, 6)
    scale = 0.1
    w1 = scale * jax.random.normal(ks[0], (d_in, hidden), jnp.float32)
    b1 = scale * jax.random.normal(ks[1], (1, hidden), jnp.float32)
    w2 = scale * jax.random.normal(ks[2], (hidden, hidden), jnp.float32)
    b2 = scale * jax.random.normal(ks[3], (1, hidden), jnp.float32)
    w3 = scale * jax.random.normal(ks[4], (hidden, d_out), jnp.float32)
    b3 = scale * jax.random.normal(ks[5], (1, d_out), jnp.float32)
    return (w1, b1, w2, b2, w3, b3)


def _reference(x, params):
    # Mirrors the kernel's bf16-operand / f32-accumulate matmul path.
    w1, b1, w2, b2, w3, b3 = params
    bf16 = jnp.bfloat16
    xb = x.astype(bf16)
    h = jnp.dot(xb, w1.astype(bf16), preferred_element_type=jnp.float32) + b1
    h = jnp.maximum(h, 0.0)
    h = jnp.dot(h.astype(bf16), w2.astype(bf16), preferred_element_type=jnp.float32) + b2
    h = jnp.maximum(h, 0.0)
    z = jnp.dot(h.astype(bf16), w3.astype(bf16), preferred_element_type=jnp.float32) + b3
    return jax.nn.softplus(z)


if __name__ == "__main__":
    # Small demo shapes (HIDDEN chosen as 128 so it is already lane-dense).
    B, D_IN, HIDDEN, D_OUT = 32, 32, 128, 1

    key = jax.random.PRNGKey(0)
    kx, kp = jax.random.split(key)
    x = jax.random.normal(kx, (B, D_IN), jnp.float32)
    params = init_params(kp, D_IN, HIDDEN, D_OUT)

    out = neural_density_network(x, params)
    out = jax.block_until_ready(out)

    ref = _reference(x, params)
    assert out.shape == (B, D_OUT)
    assert bool(jnp.all(out >= 0.0)), "softplus output must be non-negative"
    assert jnp.allclose(out, ref, atol=1e-3, rtol=1e-3), "mismatch vs reference"

    print("KERNEL_OK")
</pallas_src>

<mosaic_0001>
module attributes {stable_mosaic.version = 11 : i64} {
  func.func @ndn_kernel(%arg0: i32, %arg1: memref<32x32xbf16, #tpu.memory_space<vmem>>, %arg2: memref<32x128xbf16, #tpu.memory_space<vmem>>, %arg3: memref<1x128xf32, #tpu.memory_space<vmem>>, %arg4: memref<128x128xbf16, #tpu.memory_space<vmem>>, %arg5: memref<1x128xf32, #tpu.memory_space<vmem>>, %arg6: memref<128x128xbf16, #tpu.memory_space<vmem>>, %arg7: memref<1x128xf32, #tpu.memory_space<vmem>>, %arg8: memref<32x128xf32, #tpu.memory_space<vmem>>) attributes {dimension_semantics = [#tpu.dimension_semantics<parallel>], iteration_bounds = array<i64: 1>, scalar_prefetch = 0 : i64, scratch_operands = 0 : i64, tpu.core_type = #tpu.core_type<tc>, window_params = [{transform_indices = @transform_0, window_bounds = array<i64: 32, 32>}, {pipeline_mode = #tpu.pipeline_mode<synchronous>, transform_indices = @transform_1, window_bounds = array<i64: 32, 128>}, {pipeline_mode = #tpu.pipeline_mode<synchronous>, transform_indices = @transform_2, window_bounds = array<i64: 1, 128>}, {pipeline_mode = #tpu.pipeline_mode<synchronous>, transform_indices = @transform_3, window_bounds = array<i64: 128, 128>}, {pipeline_mode = #tpu.pipeline_mode<synchronous>, transform_indices = @transform_4, window_bounds = array<i64: 1, 128>}, {pipeline_mode = #tpu.pipeline_mode<synchronous>, transform_indices = @transform_5, window_bounds = array<i64: 128, 128>}, {pipeline_mode = #tpu.pipeline_mode<synchronous>, transform_indices = @transform_6, window_bounds = array<i64: 1, 128>}, {transform_indices = @transform_7, window_bounds = array<i64: 32, 128>}]} {
    %c0 = arith.constant 0 : index
    %c0_0 = arith.constant 0 : index
    %0 = vector.load %arg1[%c0, %c0_0] : memref<32x32xbf16, #tpu.memory_space<vmem>>, vector<32x32xbf16>
    %c0_1 = arith.constant 0 : index
    %c0_2 = arith.constant 0 : index
    %1 = vector.load %arg2[%c0_1, %c0_2] : memref<32x128xbf16, #tpu.memory_space<vmem>>, vector<32x128xbf16>
    %cst = arith.constant dense<0.000000e+00> : vector<32x128xf32>
    %2 = tpu.matmul %0, %1, %cst {dimension_numbers = #tpu.dot_dimension_numbers<[1], [0], [0], [1], [0, 0, 1, 1], [], []>} : vector<32x32xbf16>, vector<32x128xbf16>, vector<32x128xf32> -> vector<32x128xf32>
    %c0_3 = arith.constant 0 : index
    %c0_4 = arith.constant 0 : index
    %3 = vector.load %arg3[%c0_3, %c0_4] : memref<1x128xf32, #tpu.memory_space<vmem>>, vector<1x128xf32>
    %4 = vector.broadcast %3 : vector<1x128xf32> to vector<32x128xf32>
    %5 = arith.addf %2, %4 : vector<32x128xf32>
    %cst_5 = arith.constant 0.000000e+00 : f32
    %6 = vector.broadcast %cst_5 : f32 to vector<32x128xf32>
    %7 = arith.maximumf %5, %6 : vector<32x128xf32>
    %8 = arith.truncf %7 : vector<32x128xf32> to vector<32x128xbf16>
    %c0_6 = arith.constant 0 : index
    %c0_7 = arith.constant 0 : index
    %9 = vector.load %arg4[%c0_6, %c0_7] : memref<128x128xbf16, #tpu.memory_space<vmem>>, vector<128x128xbf16>
    %cst_8 = arith.constant dense<0.000000e+00> : vector<32x128xf32>
    %10 = tpu.matmul %8, %9, %cst_8 {dimension_numbers = #tpu.dot_dimension_numbers<[1], [0], [0], [1], [0, 0, 1, 1], [], []>} : vector<32x128xbf16>, vector<128x128xbf16>, vector<32x128xf32> -> vector<32x128xf32>
    %c0_9 = arith.constant 0 : index
    %c0_10 = arith.constant 0 : index
    %11 = vector.load %arg5[%c0_9, %c0_10] : memref<1x128xf32, #tpu.memory_space<vmem>>, vector<1x128xf32>
    %12 = vector.broadcast %11 : vector<1x128xf32> to vector<32x128xf32>
    %13 = arith.addf %10, %12 : vector<32x128xf32>
    %cst_11 = arith.constant 0.000000e+00 : f32
    %14 = vector.broadcast %cst_11 : f32 to vector<32x128xf32>
    %15 = arith.maximumf %13, %14 : vector<32x128xf32>
    %16 = arith.truncf %15 : vector<32x128xf32> to vector<32x128xbf16>
    %c0_12 = arith.constant 0 : index
    %c0_13 = arith.constant 0 : index
    %17 = vector.load %arg6[%c0_12, %c0_13] : memref<128x128xbf16, #tpu.memory_space<vmem>>, vector<128x128xbf16>
    %cst_14 = arith.constant dense<0.000000e+00> : vector<32x128xf32>
    %18 = tpu.matmul %16, %17, %cst_14 {dimension_numbers = #tpu.dot_dimension_numbers<[1], [0], [0], [1], [0, 0, 1, 1], [], []>} : vector<32x128xbf16>, vector<128x128xbf16>, vector<32x128xf32> -> vector<32x128xf32>
    %c0_15 = arith.constant 0 : index
    %c0_16 = arith.constant 0 : index
    %19 = vector.load %arg7[%c0_15, %c0_16] : memref<1x128xf32, #tpu.memory_space<vmem>>, vector<1x128xf32>
    %20 = vector.broadcast %19 : vector<1x128xf32> to vector<32x128xf32>
    %21 = arith.addf %18, %20 : vector<32x128xf32>
    %cst_17 = arith.constant 0.000000e+00 : f32
    %22 = vector.broadcast %cst_17 : f32 to vector<32x128xf32>
    %23 = arith.maximumf %21, %22 : vector<32x128xf32>
    %24 = vector.broadcast %cst_17 : f32 to vector<32x128xf32>
    %25 = arith.subf %21, %24 : vector<32x128xf32>
    %26 = arith.cmpf one, %25, %25 : vector<32x128xf32>
    %27 = vector.broadcast %cst_17 : f32 to vector<32x128xf32>
    %28 = arith.addf %21, %27 : vector<32x128xf32>
    %29 = math.absf %25 : vector<32x128xf32>
    %cst_18 = arith.constant 0.000000e+00 : f32
    %30 = vector.broadcast %cst_18 : f32 to vector<32x128xf32>
    %31 = arith.subf %30, %29 : vector<32x128xf32>
    %32 = math.exp %31 : vector<32x128xf32>
    %33 = math.log1p %32 : vector<32x128xf32>
    %34 = arith.addf %23, %33 : vector<32x128xf32>
    %35 = arith.select %26, %28, %34 : vector<32x128xi1>, vector<32x128xf32>
    %c0_19 = arith.constant 0 : index
    %c0_20 = arith.constant 0 : index
    %36 = vector.load %arg8[%c0_19, %c0_20] : memref<32x128xf32, #tpu.memory_space<vmem>>, vector<32x128xf32>
    tpu.vector_store %arg8[%c0_19, %c0_20], %35 {strides = array<i32>} : memref<32x128xf32, #tpu.memory_space<vmem>>, vector<32x128xf32>,
    return
  }
  func.func @transform_0(%arg0: i32) -> (i32, i32) {
    %c0_i32 = arith.constant 0 : i32
    %c0_i32_0 = arith.constant 0 : i32
    return %arg0, %c0_i32 : i32, i32
  }
  func.func @transform_1(%arg0: i32) -> (i32, i32) {
    %c0_i32 = arith.constant 0 : i32
    %c0_i32_0 = arith.constant 0 : i32
    %c0_i32_1 = arith.constant 0 : i32
    return %c0_i32, %c0_i32_0 : i32, i32
  }
  func.func @transform_2(%arg0: i32) -> (i32, i32) {
    %c0_i32 = arith.constant 0 : i32
    %c0_i32_0 = arith.constant 0 : i32
    %c0_i32_1 = arith.constant 0 : i32
    return %c0_i32, %c0_i32_0 : i32, i32
  }
  func.func @transform_3(%arg0: i32) -> (i32, i32) {
    %c0_i32 = arith.constant 0 : i32
    %c0_i32_0 = arith.constant 0 : i32
    %c0_i32_1 = arith.constant 0 : i32
    return %c0_i32, %c0_i32_0 : i32, i32
  }
  func.func @transform_4(%arg0: i32) -> (i32, i32) {
    %c0_i32 = arith.constant 0 : i32
    %c0_i32_0 = arith.constant 0 : i32
    %c0_i32_1 = arith.constant 0 : i32
    return %c0_i32, %c0_i32_0 : i32, i32
  }
  func.func @transform_5(%arg0: i32) -> (i32, i32) {
    %c0_i32 = arith.constant 0 : i32
    %c0_i32_0 = arith.constant 0 : i32
    %c0_i32_1 = arith.constant 0 : i32
    return %c0_i32, %c0_i32_0 : i32, i32
  }
  func.func @transform_6(%arg0: i32) -> (i32, i32) {
    %c0_i32 = arith.constant 0 : i32
    %c0_i32_0 = arith.constant 0 : i32
    %c0_i32_1 = arith.constant 0 : i32
    return %c0_i32, %c0_i32_0 : i32, i32
  }
  func.func @transform_7(%arg0: i32) -> (i32, i32) {
    %c0_i32 = arith.constant 0 : i32
    %c0_i32_0 = arith.constant 0 : i32
    return %arg0, %c0_i32 : i32, i32
  }
}

</mosaic_0001>

<llo_original>
// kernel: tpu_custom_call.1
$region0: #{tpu_custom_call.1}
  #allocation0 [shape = 'u32[]', space=smem, size = 0x4, offset = 0x4, fixed_abs, tag = 'smem constant byte address 0x4 - core index']
  #allocation1 [shape = 'u32[144,128]{1,0:T(1,128)}', space=vmem, size = 0x12000, scoped, tag = 'internal scratch']
  %s0 = inlined_call_operand.hbm [shape: bf16[32,32], index: 0, kind: input, shape index: {}]
  %s1 = inlined_call_operand.hbm [shape: bf16[32,128], index: 1, kind: input, shape index: {}]
  %s2 = inlined_call_operand.vmem [shape: f32[1,128], index: 2, kind: input, shape index: {}]
  %s3 = inlined_call_operand.hbm [shape: bf16[128,128], index: 3, kind: input, shape index: {}]
  %s4 = inlined_call_operand.vmem [shape: f32[1,128], index: 4, kind: input, shape index: {}]
  %s5 = inlined_call_operand.hbm [shape: bf16[128,128], index: 5, kind: input, shape index: {}]
  %s6 = inlined_call_operand.vmem [shape: f32[1,128], index: 6, kind: input, shape index: {}]
  %s7 = inlined_call_operand.hbm [shape: f32[32,128], index: 7, kind: output, shape index: {}]
  %s8 = sld [smem:[#allocation0]]
  $region54: #{tpu_custom_call.1} parent=0
    _
  %s10 = ssub.s32 1, %s8
  %s11 = scalar_select 0, %s10, %s8
  $region1: #{tpu_custom_call.1} parent=0
    #allocation2 [shape = 'u8[8192]{0}', space=vmem, size = 0x2000, scoped, tag = 'input window, operand 0, single buffered']
    #allocation3 [shape = 's32[1]{0}', space=sflag, size = 0x4, scoped, tag = 'scoped memory for tpu_custom_call.1']
    #allocation4 [shape = 's32[1]{0}', space=sflag, size = 0x4, scoped, tag = 'scoped memory for tpu_custom_call.1']
    #allocation5 [shape = 'u8[8192]{0}', space=vmem, size = 0x2000, scoped, tag = 'input window, operand 1, single buffered']
    #allocation6 [shape = 's32[1]{0}', space=sflag, size = 0x4, scoped, tag = 'scoped memory for tpu_custom_call.1']
    #allocation7 [shape = 'u8[32768]{0}', space=vmem, size = 0x8000, scoped, tag = 'input window, operand 3, single buffered']
    #allocation8 [shape = 'u8[32768]{0}', space=vmem, size = 0x8000, scoped, tag = 'input window, operand 5, single buffered']
    #allocation9 [shape = 's32[1]{0}', space=sflag, size = 0x4, scoped, tag = 'scoped memory for tpu_custom_call.1']
    #allocation10 [shape = 'u8[16384]{0}', space=vmem, size = 0x4000, scoped, tag = 'output window, operand 0, single buffered']
    %12 = vsyncpa [#allocation3], 0
    %13 = vsyncpa [#allocation6], 0
    %14 = vsyncpa [#allocation9], 0
    %15 = vsyncpa [#allocation4], 0
    // Predicated region
    $region2: #{tpu_custom_call.1} parent=1 // pred_check
      _
    $region3: #{tpu_custom_call.1} parent=1 // pred_check_branch
      %17 = sbr.rel (0) target = $region5
    $region4: #{tpu_custom_call.1} parent=1 // pred_region
      %s19 = ssub.s32 256, 256
      %20 = vsyncadd [#allocation3], %s19
      %s21 = sshll.u32 [#allocation2], 4
      %s22 = int_to_ptr.vmem [resolvable:$true] %s21
      %27 = dma.hbm_to_vmem [thread:$0]  %s0, 256, %s22, [#allocation3], 64, 64, 4
    $region5: #{tpu_custom_call.1} parent=1 // pred_fallthru
      _
    // Predicated region
    $region6: #{tpu_custom_call.1} parent=1 // pred_check
      _
    $region7: #{tpu_custom_call.1} parent=1 // pred_check_branch
      %29 = sbr.rel (0) target = $region9
    $region8: #{tpu_custom_call.1} parent=1 // pred_region
      %s31 = ssub.s32 256, 256
      %32 = vsyncadd [#allocation6], %s31
      %s33 = sshll.u32 [#allocation5], 4
      %s34 = int_to_ptr.vmem [resolvable:$true] %s33
      %39 = dma.hbm_to_vmem [thread:$0]  %s1, 256, %s34, [#allocation6], 64, 64, 4
    $region9: #{tpu_custom_call.1} parent=1 // pred_fallthru
      _
    // Predicated region
    $region10: #{tpu_custom_call.1} parent=1 // pred_check
      _
    $region11: #{tpu_custom_call.1} parent=1 // pred_check_branch
      %41 = sbr.rel (0) target = $region13
    $region12: #{tpu_custom_call.1} parent=1 // pred_region
      _
    $region13: #{tpu_custom_call.1} parent=1 // pred_fallthru
      _
    // Predicated region
    $region14: #{tpu_custom_call.1} parent=1 // pred_check
      _
    $region15: #{tpu_custom_call.1} parent=1 // pred_check_branch
      %43 = sbr.rel (0) target = $region17
    $region16: #{tpu_custom_call.1} parent=1 // pred_region
      %s45 = ssub.s32 1024, 1024
      %46 = vsyncadd [#allocation6], %s45
      %s47 = sshll.u32 [#allocation7], 4
      %s48 = int_to_ptr.vmem [resolvable:$true] %s47
      %53 = dma.hbm_to_vmem [thread:$0]  %s3, 1024, %s48, [#allocation6], 64, 64, 4
    $region17: #{tpu_custom_call.1} parent=1 // pred_fallthru
      _
    // Predicated region
    $region18: #{tpu_custom_call.1} parent=1 // pred_check
      _
    $region19: #{tpu_custom_call.1} parent=1 // pred_check_branch
      %55 = sbr.rel (0) target = $region21
    $region20: #{tpu_custom_call.1} parent=1 // pred_region
      _
    $region21: #{tpu_custom_call.1} parent=1 // pred_fallthru
      _
    // Predicated region
    $region22: #{tpu_custom_call.1} parent=1 // pred_check
      _
    $region23: #{tpu_custom_call.1} parent=1 // pred_check_branch
      %57 = sbr.rel (0) target = $region25
    $region24: #{tpu_custom_call.1} parent=1 // pred_region
      %s59 = ssub.s32 1024, 1024
      %60 = vsyncadd [#allocation9], %s59
      %s61 = sshll.u32 [#allocation8], 4
      %s62 = int_to_ptr.vmem [resolvable:$true] %s61
      %67 = dma.hbm_to_vmem [thread:$0]  %s5, 1024, %s62, [#allocation9], 64, 64, 4
    $region25: #{tpu_custom_call.1} parent=1 // pred_fallthru
      _
    // Predicated region
    $region26: #{tpu_custom_call.1} parent=1 // pred_check
      _
    $region27: #{tpu_custom_call.1} parent=1 // pred_check_branch
      %69 = sbr.rel (0) target = $region29
    $region28: #{tpu_custom_call.1} parent=1 // pred_region
      _
    $region29: #{tpu_custom_call.1} parent=1 // pred_fallthru
      _
    // Predicated region
    $region30: #{tpu_custom_call.1} parent=1 // pred_check
      _
    $region31: #{tpu_custom_call.1} parent=1 // pred_check_branch
      %71 = sbr.rel (0) target = $region33
    $region32: #{tpu_custom_call.1} parent=1 // pred_region
      %72 = dma.done [#allocation3], 256
    $region33: #{tpu_custom_call.1} parent=1 // pred_fallthru
      _
    // Predicated region
    $region34: #{tpu_custom_call.1} parent=1 // pred_check
      _
    $region35: #{tpu_custom_call.1} parent=1 // pred_check_branch
      %74 = sbr.rel (0) target = $region37
    $region36: #{tpu_custom_call.1} parent=1 // pred_region
      %75 = dma.done [#allocation6], 256
    $region37: #{tpu_custom_call.1} parent=1 // pred_fallthru
      _
    // Predicated region
    $region38: #{tpu_custom_call.1} parent=1 // pred_check
      _
    $region39: #{tpu_custom_call.1} parent=1 // pred_check_branch
      %77 = sbr.rel (0) target = $region41
    $region40: #{tpu_custom_call.1} parent=1 // pred_region
      %78 = dma.done [#allocation6], 1024
    $region41: #{tpu_custom_call.1} parent=1 // pred_fallthru
      _
    // Predicated region
    $region42: #{tpu_custom_call.1} parent=1 // pred_check
      _
    $region43: #{tpu_custom_call.1} parent=1 // pred_check_branch
      %80 = sbr.rel (0) target = $region45
    $region44: #{tpu_custom_call.1} parent=1 // pred_region
      %81 = dma.done [#allocation9], 1024
    $region45: #{tpu_custom_call.1} parent=1 // pred_fallthru
      _
    %v83 = vld [vmem:[#allocation2] sm:$0xf]
    %v84 = vld [vmem:[#allocation2 + $0x4] sm:$0xf]
    %v85 = vld [vmem:[#allocation2 + $0x8] sm:$0xf]
    %v86 = vld [vmem:[#allocation2 + $0xc] sm:$0xf]
    %v87 = vld [vmem:[#allocation5] sm:$0xf]
    %v88 = vld [vmem:[#allocation5 + $0x4] sm:$0xf]
    %v89 = vld [vmem:[#allocation5 + $0x8] sm:$0xf]
    %v90 = vld [vmem:[#allocation5 + $0xc] sm:$0xf]
    %v91 = vld [vmem:[%s2] sm:$0x1]
    %v93 = vlaneseq
    %v94 = vshrl.u32 %v93, 7
    %v95 = vsub.s32 0, %v94
    %v96 = vrot.slane %v91, %v95
    %v102 = vunpack.c.l.b16 %v83
    %v103 = vunpack.c.l.b16 %v84
    %v104 = vunpack.c.l.b16 %v85
    %v105 = vunpack.c.l.b16 %v86
    %v106 = vpack.c.b16 %v103, %v102
    %v107 = vpack.c.b16 %v105, %v104
    %v112 = vunpack.c.l.b16 %v87
    %v113 = vunpack.c.l.b16 %v88
    %v114 = vunpack.c.l.b16 %v89
    %v115 = vunpack.c.l.b16 %v90
    %v116 = vpack.c.b16 %v113, %v112
    %v117 = vpack.c.b16 %v115, %v114
    %vm120 = vcmask 261120
    %v122 = vsel %vm120, %v106, 0
    %v125 = vsel %vm120, %v107, 0
    %127 = vmatprep.subr.bf16.mxu0 0
    %128 = vmatpush1.bf16.msra.mxu0 %v116
    %129 = vmatprep.subr.bf16.mxu0 0
    %130 = vmatpush1.bf16.msra.mxu0 %v117
    %131 = vmatprep.subr.bf16.mxu0 0
    %132 = vmatpush1.bf16.msra.mxu0 0
    %133 = vmatprep.subr.bf16.mxu0 0
    %134 = vmatpush1.bf16.msra.mxu0 0
    %135 = vmatprep.subr.bf16.mxu0 0
    %136 = vmatpush1.bf16.msra.mxu0 0
    %137 = vmatprep.subr.bf16.mxu0 0
    %138 = vmatpush1.bf16.msra.mxu0 0
    %139 = vmatprep.subr.bf16.mxu0 0
    %140 = vmatpush1.bf16.msra.mxu0 0
    %141 = vmatprep.subr.bf16.mxu0 0
    %142 = vmatpush1.bf16.msra.mxu0 0
    %143 = vmatprep.subr.bf16.mxu0 0
    %144 = vmatpush1.bf16.msra.mxu0 0
    %145 = vmatprep.subr.bf16.mxu0 0
    %146 = vmatpush1.bf16.msra.mxu0 0
    %147 = vmatprep.subr.bf16.mxu0 0
    %148 = vmatpush1.bf16.msra.mxu0 0
    %149 = vmatprep.subr.bf16.mxu0 0
    %150 = vmatpush1.bf16.msra.mxu0 0
    %151 = vmatprep.subr.bf16.mxu0 0
    %152 = vmatpush1.bf16.msra.mxu0 0
    %153 = vmatprep.subr.bf16.mxu0 0
    %154 = vmatpush1.bf16.msra.mxu0 0
    %155 = vmatprep.subr.bf16.mxu0 0
    %156 = vmatpush1.bf16.msra.mxu0 0
    %157 = vmatprep.subr.bf16.mxu0 0
    %158 = vmatpush1.bf16.msra.mxu0 0
    %159 = vmatprep.mubr.bf16.mxu0 0
    %160 = vmatmul.mubr.bf16.gmra.mrb[0].mxu0 %v122
    %v161 = vpop.f32.mrb[0].mxu0
    %v162 = vadd.f32 %v96, %v161
    %v163 = vpop.f32.mrb[0].mxu0
    %v164 = vpop.f32.mrb[0].mxu0
    %v165 = vadd.f32 %v96, %v164
    %v166 = vpop.f32.mrb[0].mxu0
    %167 = vmatprep.mubr.bf16.mxu0 0
    %168 = vmatmul.mubr.bf16.gmra.mrb[0].mxu0 %v125
    %v169 = vpop.f32.mrb[0].mxu0
    %v170 = vadd.f32 %v96, %v169
    %v171 = vpop.f32.mrb[0].mxu0
    %v172 = vpop.f32.mrb[0].mxu0
    %v173 = vadd.f32 %v96, %v172
    %v174 = vpop.f32.mrb[0].mxu0
    %175 = vdwg.mxu0
    %v176 = vmax.f32 %v162, 0.0
    %v177 = vmax.f32 %v165, 0.0
    %v178 = vmax.f32 %v170, 0.0
    %v179 = vmax.f32 %v173, 0.0
    %v180 = vpack.c.bf16 %v177, %v176
    %v181 = vpack.c.bf16 %v179, %v178
    %v182 = vld [vmem:[#allocation7] sm:$0xf]
    %v183 = vld [vmem:[#allocation7 + $0x4] sm:$0xf]
    %v184 = vld [vmem:[#allocation7 + $0x8] sm:$0xf]
    %v185 = vld [vmem:[#allocation7 + $0xc] sm:$0xf]
    %v186 = vld [vmem:[#allocation7 + $0x10] sm:$0xf]
    %v187 = vld [vmem:[#allocation7 + $0x14] sm:$0xf]
    %v188 = vld [vmem:[#allocation7 + $0x18] sm:$0xf]
    %v189 = vld [vmem:[#allocation7 + $0x1c] sm:$0xf]
    %v190 = vld [vmem:[#allocation7 + $0x20] sm:$0xf]
    %v191 = vld [vmem:[#allocation7 + $0x24] sm:$0xf]
    %v192 = vld [vmem:[#allocation7 + $0x28] sm:$0xf]
    %v193 = vld [vmem:[#allocation7 + $0x2c] sm:$0xf]
    %v194 = vld [vmem:[#allocation7 + $0x30] sm:$0xf]
    %v195 = vld [vmem:[#allocation7 + $0x34] sm:$0xf]
    %v196 = vld [vmem:[#allocation7 + $0x38] sm:$0xf]
    %v197 = vld [vmem:[#allocation7 + $0x3c] sm:$0xf]
    %v198 = vld [vmem:[%s4] sm:$0x1]
    %v200 = vlaneseq
    %v201 = vshrl.u32 %v200, 7
    %v202 = vsub.s32 0, %v201
    %v203 = vrot.slane %v198, %v202
    %v221 = vunpack.c.l.b16 %v182
    %v222 = vunpack.c.l.b16 %v183
    %v223 = vunpack.c.l.b16 %v184
    %v224 = vunpack.c.l.b16 %v185
    %v225 = vunpack.c.l.b16 %v186
    %v226 = vunpack.c.l.b16 %v187
    %v227 = vunpack.c.l.b16 %v188
    %v228 = vunpack.c.l.b16 %v189
    %v229 = vunpack.c.l.b16 %v190
    %v230 = vunpack.c.l.b16 %v191
    %v231 = vunpack.c.l.b16 %v192
    %v232 = vunpack.c.l.b16 %v193
    %v233 = vunpack.c.l.b16 %v194
    %v234 = vunpack.c.l.b16 %v195
    %v235 = vunpack.c.l.b16 %v196
    %v236 = vunpack.c.l.b16 %v197
    %v237 = vpack.c.b16 %v222, %v221
    %v238 = vpack.c.b16 %v224, %v223
    %v239 = vpack.c.b16 %v226, %v225
    %v240 = vpack.c.b16 %v228, %v227
    %v241 = vpack.c.b16 %v230, %v229
    %v242 = vpack.c.b16 %v232, %v231
    %v243 = vpack.c.b16 %v234, %v233
    %v244 = vpack.c.b16 %v236, %v235
    %253 = vmatprep.subr.bf16.mxu0 0
    %254 = vmatpush1.bf16.msra.mxu0 %v237
    %255 = vmatprep.subr.bf16.mxu0 0
    %256 = vmatpush1.bf16.msra.mxu0 %v238
    %257 = vmatprep.subr.bf16.mxu0 0
    %258 = vmatpush1.bf16.msra.mxu0 %v239
    %259 = vmatprep.subr.bf16.mxu0 0
    %260 = vmatpush1.bf16.msra.mxu0 %v240
    %261 = vmatprep.subr.bf16.mxu0 0
    %262 = vmatpush1.bf16.msra.mxu0 %v241
    %263 = vmatprep.subr.bf16.mxu0 0
    %264 = vmatpush1.bf16.msra.mxu0 %v242
    %265 = vmatprep.subr.bf16.mxu0 0
    %266 = vmatpush1.bf16.msra.mxu0 %v243
    %267 = vmatprep.subr.bf16.mxu0 0
    %268 = vmatpush1.bf16.msra.mxu0 %v244
    %269 = vmatprep.subr.bf16.mxu0 0
    %270 = vmatpush1.bf16.msra.mxu0 0
    %271 = vmatprep.subr.bf16.mxu0 0
    %272 = vmatpush1.bf16.msra.mxu0 0
    %273 = vmatprep.subr.bf16.mxu0 0
    %274 = vmatpush1.bf16.msra.mxu0 0
    %275 = vmatprep.subr.bf16.mxu0 0
    %276 = vmatpush1.bf16.msra.mxu0 0
    %277 = vmatprep.subr.bf16.mxu0 0
    %278 = vmatpush1.bf16.msra.mxu0 0
    %279 = vmatprep.subr.bf16.mxu0 0
    %280 = vmatpush1.bf16.msra.mxu0 0
    %281 = vmatprep.subr.bf16.mxu0 0
    %282 = vmatpush1.bf16.msra.mxu0 0
    %283 = vmatprep.subr.bf16.mxu0 0
    %284 = vmatpush1.bf16.msra.mxu0 0
    %285 = vmatprep.mubr.bf16.mxu0 0
    %286 = vmatmul.mubr.bf16.gmra.mrb[0].mxu0 %v180
    %v287 = vpop.f32.mrb[0].mxu0
    %v288 = vadd.f32 %v203, %v287
    %v289 = vpop.f32.mrb[0].mxu0
    %v290 = vpop.f32.mrb[0].mxu0
    %v291 = vadd.f32 %v203, %v290
    %v292 = vpop.f32.mrb[0].mxu0
    %293 = vmatprep.mubr.bf16.mxu0 0
    %294 = vmatmul.mubr.bf16.gmra.mrb[0].mxu0 %v181
    %v295 = vpop.f32.mrb[0].mxu0
    %v296 = vadd.f32 %v203, %v295
    %v297 = vpop.f32.mrb[0].mxu0
    %v298 = vpop.f32.mrb[0].mxu0
    %v299 = vadd.f32 %v203, %v298
    %v300 = vpop.f32.mrb[0].mxu0
    %301 = vdwg.mxu0
    %v302 = vmax.f32 %v288, 0.0
    %v303 = vmax.f32 %v291, 0.0
    %v304 = vmax.f32 %v296, 0.0
    %v305 = vmax.f32 %v299, 0.0
    %v306 = vpack.c.bf16 %v303, %v302
    %v307 = vpack.c.bf16 %v305, %v304
    %v308 = vld [vmem:[#allocation8] sm:$0xf]
    %v309 = vld [vmem:[#allocation8 + $0x4] sm:$0xf]
    %v310 = vld [vmem:[#allocation8 + $0x8] sm:$0xf]
    %v311 = vld [vmem:[#allocation8 + $0xc] sm:$0xf]
    %v312 = vld [vmem:[#allocation8 + $0x10] sm:$0xf]
    %v313 = vld [vmem:[#allocation8 + $0x14] sm:$0xf]
    %v314 = vld [vmem:[#allocation8 + $0x18] sm:$0xf]
    %v315 = vld [vmem:[#allocation8 + $0x1c] sm:$0xf]
    %v316 = vld [vmem:[#allocation8 + $0x20] sm:$0xf]
    %v317 = vld [vmem:[#allocation8 + $0x24] sm:$0xf]
    %v318 = vld [vmem:[#allocation8 + $0x28] sm:$0xf]
    %v319 = vld [vmem:[#allocation8 + $0x2c] sm:$0xf]
    %v320 = vld [vmem:[#allocation8 + $0x30] sm:$0xf]
    %v321 = vld [vmem:[#allocation8 + $0x34] sm:$0xf]
    %v322 = vld [vmem:[#allocation8 + $0x38] sm:$0xf]
    %v323 = vld [vmem:[#allocation8 + $0x3c] sm:$0xf]
    %v324 = vld [vmem:[%s6] sm:$0x1]
    %v326 = vlaneseq
    %v327 = vshrl.u32 %v326, 7
    %v328 = vsub.s32 0, %v327
    %v329 = vrot.slane %v324, %v328
    %v347 = vunpack.c.l.b16 %v308
    %v348 = vunpack.c.l.b16 %v309
    %v349 = vunpack.c.l.b16 %v310
    %v350 = vunpack.c.l.b16 %v311
    %v351 = vunpack.c.l.b16 %v312
    %v352 = vunpack.c.l.b16 %v313
    %v353 = vunpack.c.l.b16 %v314
    %v354 = vunpack.c.l.b16 %v315
    %v355 = vunpack.c.l.b16 %v316
    %v356 = vunpack.c.l.b16 %v317
    %v357 = vunpack.c.l.b16 %v318
    %v358 = vunpack.c.l.b16 %v319
    %v359 = vunpack.c.l.b16 %v320
    %v360 = vunpack.c.l.b16 %v321
    %v361 = vunpack.c.l.b16 %v322
    %v362 = vunpack.c.l.b16 %v323
    %v363 = vpack.c.b16 %v348, %v347
    %v364 = vpack.c.b16 %v350, %v349
    %v365 = vpack.c.b16 %v352, %v351
    %v366 = vpack.c.b16 %v354, %v353
    %v367 = vpack.c.b16 %v356, %v355
    %v368 = vpack.c.b16 %v358, %v357
    %v369 = vpack.c.b16 %v360, %v359
    %v370 = vpack.c.b16 %v362, %v361
    %379 = vmatprep.subr.bf16.mxu0 0
    %380 = vmatpush1.bf16.msra.mxu0 %v363
    %381 = vmatprep.subr.bf16.mxu0 0
    %382 = vmatpush1.bf16.msra.mxu0 %v364
    %383 = vmatprep.subr.bf16.mxu0 0
    %384 = vmatpush1.bf16.msra.mxu0 %v365
    %385 = vmatprep.subr.bf16.mxu0 0
    %386 = vmatpush1.bf16.msra.mxu0 %v366
    %387 = vmatprep.subr.bf16.mxu0 0
    %388 = vmatpush1.bf16.msra.mxu0 %v367
    %389 = vmatprep.subr.bf16.mxu0 0
    %390 = vmatpush1.bf16.msra.mxu0 %v368
    %391 = vmatprep.subr.bf16.mxu0 0
    %392 = vmatpush1.bf16.msra.mxu0 %v369
    %393 = vmatprep.subr.bf16.mxu0 0
    %394 = vmatpush1.bf16.msra.mxu0 %v370
    %395 = vmatprep.subr.bf16.mxu0 0
    %396 = vmatpush1.bf16.msra.mxu0 0
    %397 = vmatprep.subr.bf16.mxu0 0
    %398 = vmatpush1.bf16.msra.mxu0 0
    %399 = vmatprep.subr.bf16.mxu0 0
    %400 = vmatpush1.bf16.msra.mxu0 0
    %401 = vmatprep.subr.bf16.mxu0 0
    %402 = vmatpush1.bf16.msra.mxu0 0
    %403 = vmatprep.subr.bf16.mxu0 0
    %404 = vmatpush1.bf16.msra.mxu0 0
    %405 = vmatprep.subr.bf16.mxu0 0
    %406 = vmatpush1.bf16.msra.mxu0 0
    %407 = vmatprep.subr.bf16.mxu0 0
    %408 = vmatpush1.bf16.msra.mxu0 0
    %409 = vmatprep.subr.bf16.mxu0 0
    %410 = vmatpush1.bf16.msra.mxu0 0
    %411 = vmatprep.mubr.bf16.mxu0 0
    %412 = vmatmul.mubr.bf16.gmra.mrb[0].mxu0 %v306
    %v413 = vpop.f32.mrb[0].mxu0
    %v414 = vadd.f32 %v329, %v413
    %v415 = vpop.f32.mrb[0].mxu0
    %v416 = vpop.f32.mrb[0].mxu0
    %v417 = vadd.f32 %v329, %v416
    %v418 = vpop.f32.mrb[0].mxu0
    %419 = vmatprep.mubr.bf16.mxu0 0
    %420 = vmatmul.mubr.bf16.gmra.mrb[0].mxu0 %v307
    %v421 = vpop.f32.mrb[0].mxu0
    %v422 = vadd.f32 %v329, %v421
    %v423 = vpop.f32.mrb[0].mxu0
    %v424 = vpop.f32.mrb[0].mxu0
    %v425 = vadd.f32 %v329, %v424
    %v426 = vpop.f32.mrb[0].mxu0
    %427 = vdwg.mxu0
    %v428 = vmax.f32 %v414, 0.0
    %v429 = vmax.f32 %v417, 0.0
    %v430 = vmax.f32 %v422, 0.0
    %v431 = vmax.f32 %v425, 0.0
    %vm432 = vcmp.ne.f32.partialorder %v414, %v414
    %vm433 = vcmp.ne.f32.partialorder %v417, %v417
    %vm434 = vcmp.ne.f32.partialorder %v422, %v422
    %vm435 = vcmp.ne.f32.partialorder %v425, %v425
    %v436 = vadd.f32 %v414, 0.0
    %v437 = vadd.f32 %v417, 0.0
    %v438 = vadd.f32 %v422, 0.0
    %v439 = vadd.f32 %v425, 0.0
    %v440 = vand.u32 2147483647, %v414
    %v441 = vand.u32 2147483647, %v417
    %v442 = vand.u32 2147483647, %v422
    %v443 = vand.u32 2147483647, %v425
    %v444 = vsub.f32 0.0, %v440
    %v445 = vsub.f32 0.0, %v441
    %v446 = vsub.f32 0.0, %v442
    %v447 = vsub.f32 0.0, %v443
    %v448 = vmul.f32 %v444, 1.442695
    %v449 = vpow.pop %v448
    %v450 = vmul.f32 %v445, 1.442695
    %v451 = vpow.pop %v450
    %v452 = vmul.f32 %v446, 1.442695
    %v453 = vpow.pop %v452
    %v454 = vmul.f32 %v447, 1.442695
    %v455 = vpow.pop %v454
    %v456 = vadd.f32 %v449, 1.0
    %v457 = vlog2.pop %v456
    %v458 = vmul.f32 %v457, 0.6931472
    %v459 = vmul.f32 -0.5, %v449
    %v460 = vadd.f32 %v459, 1.0
    %v461 = vmul.f32 %v460, %v449
    %v462 = vand.u32 2147483647, %v449
    %vm463 = vcmp.lt.f32.partialorder %v462, 0.0004427343
    %v464 = vsel %vm463, %v461, %v458
    %v465 = vadd.f32 %v451, 1.0
    %v466 = vlog2.pop %v465
    %v467 = vmul.f32 %v466, 0.6931472
    %v468 = vmul.f32 -0.5, %v451
    %v469 = vadd.f32 %v468, 1.0
    %v470 = vmul.f32 %v469, %v451
    %v471 = vand.u32 2147483647, %v451
    %vm472 = vcmp.lt.f32.partialorder %v471, 0.0004427343
    %v473 = vsel %vm472, %v470, %v467
    %v474 = vadd.f32 %v453, 1.0
    %v475 = vlog2.pop %v474
    %v476 = vmul.f32 %v475, 0.6931472
    %v477 = vmul.f32 -0.5, %v453
    %v478 = vadd.f32 %v477, 1.0
    %v479 = vmul.f32 %v478, %v453
    %v480 = vand.u32 2147483647, %v453
    %vm481 = vcmp.lt.f32.partialorder %v480, 0.0004427343
    %v482 = vsel %vm481, %v479, %v476
    %v483 = vadd.f32 %v455, 1.0
    %v484 = vlog2.pop %v483
    %v485 = vmul.f32 %v484, 0.6931472
    %v486 = vmul.f32 -0.5, %v455
    %v487 = vadd.f32 %v486, 1.0
    %v488 = vmul.f32 %v487, %v455
    %v489 = vand.u32 2147483647, %v455
    %vm490 = vcmp.lt.f32.partialorder %v489, 0.0004427343
    %v491 = vsel %vm490, %v488, %v485
    %v492 = vadd.f32 %v428, %v464
    %v493 = vadd.f32 %v429, %v473
    %v494 = vadd.f32 %v430, %v482
    %v495 = vadd.f32 %v431, %v491
    %v496 = vsel %vm432, %v436, %v492
    %v497 = vsel %vm433, %v437, %v493
    %v498 = vsel %vm434, %v438, %v494
    %v499 = vsel %vm435, %v439, %v495
    %500 = vst [vmem:[#allocation10] sm:$0xff] %v496
    %501 = vst [vmem:[#allocation10 + $0x8] sm:$0xff] %v497
    %502 = vst [vmem:[#allocation10 + $0x10] sm:$0xff] %v498
    %503 = vst [vmem:[#allocation10 + $0x18] sm:$0xff] %v499
    // Predicated region
    $region46: #{tpu_custom_call.1} parent=1 // pred_check
      _
    $region47: #{tpu_custom_call.1} parent=1 // pred_check_branch
      %505 = sbr.rel (0) target = $region49
    $region48: #{tpu_custom_call.1} parent=1 // pred_region
      %s507 = ssub.s32 512, 512
      %508 = vsyncadd [#allocation4], %s507
      %s509 = sshll.u32 [#allocation10], 4
      %s510 = int_to_ptr.vmem [resolvable:$true] %s509
      %515 = dma.vmem_to_hbm [thread:$0]  %s510, 512, %s7, [#allocation4], 128, 128, 8
    $region49: #{tpu_custom_call.1} parent=1 // pred_fallthru
      _
    // Predicated region
    $region50: #{tpu_custom_call.1} parent=1 // pred_check
      _
    $region51: #{tpu_custom_call.1} parent=1 // pred_check_branch
      %517 = sbr.rel (0) target = $region53
    $region52: #{tpu_custom_call.1} parent=1 // pred_region
      %518 = dma.done [#allocation4], 512
    $region53: #{tpu_custom_call.1} parent=1 // pred_fallthru
      _
    %519 = vsyncpa [#allocation3], 1
    %520 = vsyncpa [#allocation6], 1
    %521 = vsyncpa [#allocation9], 1
    %522 = vsyncpa [#allocation4], 1

</llo_original>
